<compile_context>
chip_gen: v6e
topology: v6e:2x2x1
jax: 0.10.0
libtpu: 0.0.40
codegen_flags: <defaults>
</compile_context>

<pallas_src>
import functools

import jax
import jax.numpy as jnp
from jax import lax
from jax.experimental import pallas as pl
from jax.experimental.pallas import tpu as pltpu

NUM_LOSSES = 2
_LANES = 128
# Row-block size for the streaming reduction: (512, 128) f32 = 256 KiB/buffer.
# 2 inputs x 2 pipeline buffers + 2 accumulators ~= 1.5 MiB of VMEM — safely
# inside v7x's 32 MiB scoped / 64 MiB physical budget (and v5e's 16 MiB default).
_MAX_TILE_ROWS = 512
# Leading "parallel" grid axis: splits row blocks across the 2 TensorCores on
# v7x; on v5e/v6e (1 TC) it is just two short serial passes (correct, ~free).
_NCORES = 2


# -----------------------------------------------------------------------------
# Module-faithful kernel:  out = sum_i 0.5 * exp(p_i) * loss_i + p_i
# A ~10-FLOP standalone kernel is pure launch overhead; in real training use
# awl_with_fused_losses below (same math fused into the reduction epilogue).
# Kept for the generic "precomputed losses -> weighted sum" module interface.
# -----------------------------------------------------------------------------
def _awl_kernel(l_ref, p_ref, o_ref):
    l = l_ref[...]                        # (1, num) f32
    p = p_ref[...]                        # (1, num) f32
    weighted = 0.5 * jnp.exp(p) * l + p   # EUP exp + VPU mul/add, one vreg
    if weighted.shape[1] == 2:
        # Explicit two-lane add instead of a cross-lane XLU reduce.
        o_ref[...] = weighted[:, 0:1] + weighted[:, 1:2]
    else:
        o_ref[...] = jnp.sum(weighted, axis=1, keepdims=True)


@jax.jit
def automatic_weighted_loss(losses, params):
    """losses: (num,), params: (num,) -> scalar f32 (module forward)."""
    l = losses.reshape(1, -1).astype(jnp.float32)   # (1, num) — no jnp.stack
    p = params.reshape(1, -1).astype(jnp.float32)   # (1, num)
    out = pl.pallas_call(
        _awl_kernel,
        out_shape=jax.ShapeDtypeStruct((1, 1), jnp.float32),
        in_specs=[pl.BlockSpec(memory_space=pltpu.VMEM),
                  pl.BlockSpec(memory_space=pltpu.VMEM)],
        out_specs=pl.BlockSpec(memory_space=pltpu.VMEM),
    )(l, p)
    return out[0, 0]   # fuses inside the same jit


# -----------------------------------------------------------------------------
# Fused, gridded kernel: streaming sum-of-squares for two task tensors +
# AutomaticWeightedLoss weighting, single pallas_call.
# Each core c processes row blocks [c*steps, (c+1)*steps) and emits one partial
# weighted sum; the "+ p_i" bias terms are added only by core 0.
# -----------------------------------------------------------------------------
def _fused_partial_kernel(n_a, n_b, tile_a, tile_b, steps,
                          a_ref, b_ref, p_ref, o_ref, acc_a, acc_b):
    c = pl.program_id(0)          # core slot (parallel axis)
    i = pl.program_id(1)          # row-block step for this core (arbitrary axis)

    @pl.when(i == 0)
    def _init():
        acc_a[...] = jnp.zeros_like(acc_a)
        acc_b[...] = jnp.zeros_like(acc_b)

    blk = c * steps + i           # unclamped linear block position

    def masked_sq(x, n, tile_r):
        # Cast AFTER load (halves HBM traffic for bf16 inputs) and mask by the
        # global element index: handles the ragged tail of the last block and
        # the clamped/repeated blocks a core sees past its tensor's extent.
        xf = x.astype(jnp.float32)
        row = lax.broadcasted_iota(jnp.int32, (tile_r, _LANES), 0)
        col = lax.broadcasted_iota(jnp.int32, (tile_r, _LANES), 1)
        idx = (blk * tile_r + row) * _LANES + col
        return jnp.where(idx < n, xf * xf, 0.0)

    # Per-lane elementwise accumulation (VPU only); the cross-lane/sublane
    # reduce is deferred to the epilogue so the XLU is hit once per core,
    # not once per grid step.
    acc_a[...] += masked_sq(a_ref[...], n_a, tile_a)
    acc_b[...] += masked_sq(b_ref[...], n_b, tile_b)

    @pl.when(i == steps - 1)
    def _epilogue():
        sa = jnp.sum(jnp.sum(acc_a[...], axis=1, keepdims=True),
                     axis=0, keepdims=True)               # (1, 1)
        sb = jnp.sum(jnp.sum(acc_b[...], axis=1, keepdims=True),
                     axis=0, keepdims=True)               # (1, 1)
        loss1 = sa * (1.0 / n_a)                          # mean(a*a)
        loss2 = sb * (1.0 / n_b)                          # mean(b*b)
        p = p_ref[...]                                    # (1, 2)
        w = 0.5 * jnp.exp(p)                              # EUP
        part = w[:, 0:1] * loss1 + w[:, 1:2] * loss2      # (1, 1)
        bias = p[:, 0:1] + p[:, 1:2]                      # "+ p_i" terms, once
        part = part + jnp.where(c == 0, bias, jnp.zeros_like(bias))
        o_ref[...] = part.reshape(1, 1, 1)


def _rows128(x):
    """Flatten to (rows, 128) in the ORIGINAL dtype (no wrapper cast/pad on the
    lane-aligned path); the kernel masks by the true element count."""
    flat = x.reshape(-1)
    n = flat.shape[0]
    rows = pl.cdiv(n, _LANES)
    pad = rows * _LANES - n
    if pad:
        # TODO(synk): only reached when numel % 128 != 0; costs one extra HBM
        # pass — feed lane-aligned loss tensors upstream to avoid it.
        # Correctness never depends on this pad (kernel masks by true count).
        flat = jnp.pad(flat, (0, pad))
    return flat.reshape(rows, _LANES), n


def _pick_tile(rows):
    # Full extent if it fits one block (always layout-legal), otherwise a
    # multiple-of-8-sublane tile; partial last blocks are masked in-kernel.
    return rows if rows <= _MAX_TILE_ROWS else _MAX_TILE_ROWS


@jax.jit
def awl_with_fused_losses(a, b, params):
    """Fused mean(a*a), mean(b*b) reductions + AutomaticWeightedLoss epilogue."""
    a2d, n_a = _rows128(a)
    b2d, n_b = _rows128(b)
    p2d = params.reshape(1, NUM_LOSSES).astype(jnp.float32)

    tile_a = _pick_tile(a2d.shape[0])
    tile_b = _pick_tile(b2d.shape[0])
    blocks_a = pl.cdiv(a2d.shape[0], tile_a)
    blocks_b = pl.cdiv(b2d.shape[0], tile_b)
    steps = pl.cdiv(max(blocks_a, blocks_b), _NCORES)

    # Explicit scoped-VMEM budget: 2x-buffered inputs + accumulators + margin,
    # capped at 32 MiB so it stays valid on v7x's 64 MiB physical VMEM.
    a_bytes = tile_a * _LANES * a2d.dtype.itemsize
    b_bytes = tile_b * _LANES * b2d.dtype.itemsize
    acc_bytes = (tile_a + tile_b) * _LANES * 4
    vmem_limit = int(min(32 * 2**20,
                         max(4 * 2**20,
                             3 * (a_bytes + b_bytes) + acc_bytes + 2**20)))

    cost = pl.CostEstimate(
        flops=3 * (n_a + n_b) + 64,
        transcendentals=2 * _NCORES,
        bytes_accessed=(a2d.size * a2d.dtype.itemsize
                        + b2d.size * b2d.dtype.itemsize
                        + NUM_LOSSES * 4 + _NCORES * 4))

    partials = pl.pallas_call(
        functools.partial(_fused_partial_kernel, n_a, n_b, tile_a, tile_b, steps),
        out_shape=jax.ShapeDtypeStruct((_NCORES, 1, 1), jnp.float32),
        grid=(_NCORES, steps),
        in_specs=[
            # Past-the-end block indices are clamped: the repeated index skips
            # the DMA and the in-kernel mask zeroes that block's contribution.
            pl.BlockSpec((tile_a, _LANES),
                         lambda c, i: (jnp.minimum(c * steps + i, blocks_a - 1), 0)),
            pl.BlockSpec((tile_b, _LANES),
                         lambda c, i: (jnp.minimum(c * steps + i, blocks_b - 1), 0)),
            pl.BlockSpec((1, NUM_LOSSES), lambda c, i: (0, 0)),
        ],
        out_specs=pl.BlockSpec((1, 1, 1), lambda c, i: (c, 0, 0)),
        scratch_shapes=[pltpu.VMEM((tile_a, _LANES), jnp.float32),
                        pltpu.VMEM((tile_b, _LANES), jnp.float32)],
        compiler_params=pltpu.CompilerParams(
            dimension_semantics=("parallel", "arbitrary"),
            vmem_limit_bytes=vmem_limit),
        cost_estimate=cost,
    )(a2d, b2d, p2d)
    # Tiny cross-core combine (2 adds): left to XLA inside the same jit.
    return jnp.sum(partials)


if __name__ == "__main__":
    key = jax.random.PRNGKey(0)
    k1, k2 = jax.random.split(key)

    # torch.ones(num) init for the learnable weighting params.
    params = jnp.ones((NUM_LOSSES,), dtype=jnp.float32)

    # Two small task tensors whose MSE-like losses feed the module.
    a = jax.random.normal(k1, (2, 4, 16, 16), dtype=jnp.float32)   # 2048 elems
    b = jax.random.normal(k2, (2, 8, 32), dtype=jnp.float32)       # 512 elems
    loss1 = jnp.mean(a * a)
    loss2 = jnp.mean(b * b)
    losses = jnp.stack([loss1, loss2]).astype(jnp.float32)

    # Pure-JAX reference (matches the PyTorch forward exactly).
    ref = jnp.sum(0.5 * jnp.exp(params) * losses + params)

    # 1) Module-faithful kernel on precomputed scalar losses.
    out_awl = jax.block_until_ready(automatic_weighted_loss(losses, params))
    assert jnp.allclose(out_awl, ref, rtol=1e-6, atol=1e-6), (out_awl, ref)

    # 2) Fused, gridded kernel: loss reductions + weighting in one pallas_call.
    out_fused = jax.block_until_ready(awl_with_fused_losses(a, b, params))
    assert jnp.allclose(out_fused, ref, rtol=1e-5, atol=1e-5), (out_fused, ref)

    print("KERNEL_OK")
</pallas_src>

<mosaic_0001>
module attributes {stable_mosaic.version = 11 : i64} {
  func.func @_awl_kernel(%arg0: memref<1x2xf32, #tpu.memory_space<vmem>>, %arg1: memref<1x2xf32, #tpu.memory_space<vmem>>, %arg2: memref<1x1xf32, #tpu.memory_space<vmem>>) attributes {dimension_semantics = [], scalar_prefetch = 0 : i64, scratch_operands = 0 : i64, tpu.core_type = #tpu.core_type<tc>} {
    %c0 = arith.constant 0 : index
    %c0_0 = arith.constant 0 : index
    %0 = vector.load %arg0[%c0, %c0_0] : memref<1x2xf32, #tpu.memory_space<vmem>>, vector<1x2xf32>
    %c0_1 = arith.constant 0 : index
    %c0_2 = arith.constant 0 : index
    %1 = vector.load %arg1[%c0_1, %c0_2] : memref<1x2xf32, #tpu.memory_space<vmem>>, vector<1x2xf32>
    %2 = math.exp %1 : vector<1x2xf32>
    %cst = arith.constant 5.000000e-01 : f32
    %3 = vector.broadcast %cst : f32 to vector<1x2xf32>
    %4 = arith.mulf %3, %2 : vector<1x2xf32>
    %5 = arith.mulf %4, %0 : vector<1x2xf32>
    %6 = arith.addf %5, %1 : vector<1x2xf32>
    %7 = vector.extract_strided_slice %6 {offsets = [0, 0], sizes = [1, 1], strides = [1, 1]} : vector<1x2xf32> to vector<1x1xf32>
    %8 = vector.extract_strided_slice %6 {offsets = [0, 1], sizes = [1, 1], strides = [1, 1]} : vector<1x2xf32> to vector<1x1xf32>
    %9 = arith.addf %7, %8 : vector<1x1xf32>
    %c0_3 = arith.constant 0 : index
    %c0_4 = arith.constant 0 : index
    %10 = vector.load %arg2[%c0_3, %c0_4] : memref<1x1xf32, #tpu.memory_space<vmem>>, vector<1x1xf32>
    tpu.vector_store %arg2[%c0_3, %c0_4], %9 {strides = array<i32>} : memref<1x1xf32, #tpu.memory_space<vmem>>, vector<1x1xf32>,
    return
  }
}

</mosaic_0001>

<llo_original>
// kernel: automatic_weighted_loss.1
$region0: #{automatic_weighted_loss.1}
  #allocation0 [shape = 'u32[]', space=smem, size = 0x4, offset = 0x4, fixed_abs, tag = 'smem constant byte address 0x4 - core index']
  #allocation1 [shape = 'u32[144,128]{1,0:T(1,128)}', space=vmem, size = 0x12000, scoped, tag = 'internal scratch']
  %s0 = inlined_call_operand.vmem [shape: f32[1,2], index: 0, kind: input, shape index: {}]
  %s1 = inlined_call_operand.vmem [shape: f32[1,2], index: 1, kind: input, shape index: {}]
  %s2 = inlined_call_operand.hbm [shape: f32[1,1], index: 2, kind: output, shape index: {}]
  %s3 = sld [smem:[#allocation0]]
  $region18: #{automatic_weighted_loss.1} parent=0
    _
  %s5 = ssub.s32 1, %s3
  %s6 = scalar_select 0, %s5, %s3
  $region1: #{automatic_weighted_loss.1} parent=0
    #allocation2 [shape = 'u8[512]{0}', space=vmem, size = 0x400, scoped, tag = 'output window, operand 0, single buffered']
    #allocation3 [shape = 's32[1]{0}', space=sflag, size = 0x4, scoped, tag = 'scoped memory for automatic_weighted_loss.1']
    %7 = vsyncpa [#allocation3], 0
    // Predicated region
    $region2: #{automatic_weighted_loss.1} parent=1 // pred_check
      _
    $region3: #{automatic_weighted_loss.1} parent=1 // pred_check_branch
      %9 = sbr.rel (0) target = $region5
    $region4: #{automatic_weighted_loss.1} parent=1 // pred_region
      _
    $region5: #{automatic_weighted_loss.1} parent=1 // pred_fallthru
      _
    // Predicated region
    $region6: #{automatic_weighted_loss.1} parent=1 // pred_check
      _
    $region7: #{automatic_weighted_loss.1} parent=1 // pred_check_branch
      %11 = sbr.rel (0) target = $region9
    $region8: #{automatic_weighted_loss.1} parent=1 // pred_region
      _
    $region9: #{automatic_weighted_loss.1} parent=1 // pred_fallthru
      _
    %v12 = vld [vmem:[%s0] sm:$0x1]
    %v13 = vld [vmem:[%s1] sm:$0x1]
    %v14 = vmul.f32 %v13, 1.442695
    %v15 = vpow.pop %v14
    %v16 = vmul.f32 %v15, 0.5
    %v17 = vmul.f32 %v16, %v12
    %v18 = vadd.f32 %v17, %v13
    %20 = vrot.lane.b32.xlu0 %v18, 127
    %v21 = vpop.permute.xlu0 %20
    %v23 = vadd.f32 %v18, %v21
    %vm24 = vcmask 0
    %25 = vst.msk [vmem:[#allocation2] sm:$0x1] %vm24, %v23
    // Predicated region
    $region10: #{automatic_weighted_loss.1} parent=1 // pred_check
      _
    $region11: #{automatic_weighted_loss.1} parent=1 // pred_check_branch
      %27 = sbr.rel (0) target = $region13
    $region12: #{automatic_weighted_loss.1} parent=1 // pred_region
      %s29 = ssub.s32 16, 16
      %30 = vsyncadd [#allocation3], %s29
      %s32 = sshll.u32 [#allocation2], 4
      %s33 = int_to_ptr.vmem [resolvable:$true] %s32
      %35 = dma.vmem_to_hbm [thread:$0]  %s33, 16, %s2, [#allocation3]
    $region13: #{automatic_weighted_loss.1} parent=1 // pred_fallthru
      _
    // Predicated region
    $region14: #{automatic_weighted_loss.1} parent=1 // pred_check
      _
    $region15: #{automatic_weighted_loss.1} parent=1 // pred_check_branch
      %37 = sbr.rel (0) target = $region17
    $region16: #{automatic_weighted_loss.1} parent=1 // pred_region
      %38 = dma.done [#allocation3], 16
    $region17: #{automatic_weighted_loss.1} parent=1 // pred_fallthru
      _
    %39 = vsyncpa [#allocation3], 1

</llo_original>
